<compile_context>
chip_gen: v7x
topology: tpu7x:2x2x1
jax: 0.10.0
libtpu: 0.0.40
codegen_flags: <defaults>
</compile_context>

<pallas_src>
import functools

import jax
import jax.numpy as jnp
from jax.experimental import pallas as pl
from jax.experimental.pallas import tpu as pltpu


def _round_up(x, m):
    return (x + m - 1) // m * m


def _pick_tile(dim, cap, quantum):
    """Largest multiple of `quantum` that divides `dim` and is <= cap.

    `dim` must itself be a multiple of `quantum`.
    """
    best = quantum
    t = quantum
    limit = min(cap, dim)
    while t <= limit:
        if dim % t == 0:
            best = t
        t += quantum
    return best


def _fused_linear_kernel(h_ref, w_ref, b_ref, o_ref):
    """o = h @ W + b, whole K in one block (no reduction grid axis)."""
    h = h_ref[...].astype(w_ref.dtype)          # cast on-chip (VALU slack under MXU)
    acc = jnp.dot(h, w_ref[...], preferred_element_type=jnp.float32)
    o_ref[...] = (acc + b_ref[...]).astype(o_ref.dtype)


def _fused_linear_kernel_ktiled(h_ref, w_ref, b_ref, o_ref, acc_ref):
    """o = h @ W + b with K tiled on grid axis 2 (f32 VMEM accumulator)."""
    k = pl.program_id(2)

    @pl.when(k == 0)
    def _():
        acc_ref[...] = jnp.zeros_like(acc_ref)

    acc_ref[...] += jnp.dot(h_ref[...].astype(w_ref.dtype), w_ref[...],
                            preferred_element_type=jnp.float32)

    @pl.when(k == pl.num_programs(2) - 1)
    def _():
        o_ref[...] = (acc_ref[...] + b_ref[...]).astype(o_ref.dtype)


def make_normal_parameter(w_mu, b_mu, w_ls, b_ls, *,
                          compute_dtype=jnp.bfloat16,
                          tm_cap=256, tn_cap=256, tk_cap=2048):
    """Build a jitted forward for NormalParameter.

    w_mu, w_ls: [In, Out] (transpose of PyTorch's [out, in]); b_*: [Out].
    Returns apply(h) -> (mu, log_sigma), each [B, Out] in h.dtype.
    All weight-side prep happens here, once.
    """
    In, Out = w_mu.shape
    Out_pad = _round_up(Out, 128)
    N_pad = 2 * Out_pad

    # K is padded only if the reduction actually has to be tiled.
    k_tiled = In > tk_cap
    K_pad = _round_up(In, 128) if k_tiled else In
    tk = _pick_tile(K_pad, tk_cap, 128) if k_tiled else In

    # ---- one-time fused / padded parameters (closed over by apply) ----------
    w_fused = jnp.zeros((K_pad, N_pad), jnp.float32)
    w_fused = w_fused.at[:In, :Out].set(w_mu.astype(jnp.float32))
    w_fused = w_fused.at[:In, Out_pad:Out_pad + Out].set(w_ls.astype(jnp.float32))
    w_fused = w_fused.astype(compute_dtype)

    b_fused = jnp.zeros((1, N_pad), jnp.float32)
    b_fused = b_fused.at[0, :Out].set(b_mu.astype(jnp.float32))
    b_fused = b_fused.at[0, Out_pad:Out_pad + Out].set(b_ls.astype(jnp.float32))

    # tn <= one head's padded width: >= 2 parallel N tiles (both v7x cores get
    # work) and each output tile is lane-aligned inside a single head.
    tn = _pick_tile(N_pad, min(tn_cap, Out_pad), 128)
    n_tiles = N_pad // tn
    w_itemsize = jnp.dtype(compute_dtype).itemsize

    @jax.jit
    def apply(h):
        B, In_h = h.shape
        assert In_h == In, "h feature dim does not match the weights"
        out_dtype = h.dtype
        h_itemsize = jnp.dtype(out_dtype).itemsize

        # ---- batch tiling: no wrapper copy of h in the common case ----------
        if B <= tm_cap:
            tm, B_pad = B, B                     # block == full dim -> legal
        else:
            B_pad = _round_up(B, 8)
            tm = _pick_tile(B_pad, tm_cap, 8)

        h_in = h
        if B_pad != B or K_pad != In:
            h_in = jnp.pad(h, ((0, B_pad - B), (0, K_pad - In)))

        b_tiles = B_pad // tm

        cost = pl.CostEstimate(
            flops=2 * B_pad * K_pad * N_pad,
            transcendentals=0,
            bytes_accessed=(B_pad * K_pad * h_itemsize
                            + K_pad * N_pad * w_itemsize
                            + N_pad * 4
                            + B_pad * N_pad * h_itemsize),
        )

        # Double-buffered per-step VMEM footprint; only set an explicit limit
        # when we exceed the conservative 16 MiB scoped default (v7x-safe cap).
        fp = 2 * (tm * tk * h_itemsize          # h tile
                  + tk * tn * w_itemsize        # weight tile
                  + tn * 4                      # bias tile
                  + tm * tn * h_itemsize)       # output tile
        if k_tiled:
            fp += tm * tn * 4                   # f32 accumulator
        vmem_limit = None
        if fp > (16 << 20):
            vmem_limit = min(int(fp * 3 // 2), 48 << 20)

        if not k_tiled:
            grid_spec = pltpu.PrefetchScalarGridSpec(
                num_scalar_prefetch=0,
                grid=(n_tiles, b_tiles),         # batch innermost
                in_specs=[
                    pl.BlockSpec((tm, In), lambda j, i: (i, 0)),
                    # Ignores the batch index AND batch is the innermost grid
                    # axis -> this weight block stays resident across batch
                    # tiles; it is re-DMA'd only when j (output columns) moves.
                    pl.BlockSpec((In, tn), lambda j, i: (0, j)),
                    pl.BlockSpec((1, tn), lambda j, i: (0, j)),
                ],
                out_specs=pl.BlockSpec((tm, tn), lambda j, i: (i, j)),
            )
            out = pl.pallas_call(
                _fused_linear_kernel,
                out_shape=jax.ShapeDtypeStruct((B_pad, N_pad), out_dtype),
                grid_spec=grid_spec,
                compiler_params=pltpu.CompilerParams(
                    dimension_semantics=("parallel", "parallel"),
                    vmem_limit_bytes=vmem_limit),
                cost_estimate=cost,
            )(h_in, w_fused, b_fused)
        else:
            grid = (n_tiles, b_tiles, K_pad // tk)
            grid_spec = pltpu.PrefetchScalarGridSpec(
                num_scalar_prefetch=0,
                grid=grid,
                in_specs=[
                    pl.BlockSpec((tm, tk), lambda j, i, k: (i, k)),
                    pl.BlockSpec((tk, tn), lambda j, i, k: (k, j)),
                    pl.BlockSpec((1, tn), lambda j, i, k: (0, j)),
                ],
                out_specs=pl.BlockSpec((tm, tn), lambda j, i, k: (i, j)),
                scratch_shapes=[pltpu.VMEM((tm, tn), jnp.float32)],
            )
            out = pl.pallas_call(
                _fused_linear_kernel_ktiled,
                out_shape=jax.ShapeDtypeStruct((B_pad, N_pad), out_dtype),
                grid_spec=grid_spec,
                compiler_params=pltpu.CompilerParams(
                    dimension_semantics=("parallel", "parallel", "arbitrary"),
                    vmem_limit_bytes=vmem_limit),
                cost_estimate=cost,
            )(h_in, w_fused, b_fused)

        # Per-head 128-aligned padding -> the split is a lane-aligned slice.
        mu = out[:B, :Out]
        log_sigma = out[:B, Out_pad:Out_pad + Out]
        return mu, log_sigma

    return apply


def init_params(key, in_features, out_features):
    """Deterministic init matching the PyTorch module's reset_parameters():
    xavier_normal_ on weights, standard normal on biases."""
    k1, k2, k3, k4 = jax.random.split(key, 4)
    xavier_std = (2.0 / (in_features + out_features)) ** 0.5
    # stored as [in, out] (transpose of PyTorch's [out, in] layout)
    w_mu = jax.random.normal(k1, (in_features, out_features), jnp.float32) * xavier_std
    w_ls = jax.random.normal(k2, (in_features, out_features), jnp.float32) * xavier_std
    b_mu = jax.random.normal(k3, (out_features,), jnp.float32)
    b_ls = jax.random.normal(k4, (out_features,), jnp.float32)
    return w_mu, b_mu, w_ls, b_ls


if __name__ == "__main__":
    key = jax.random.PRNGKey(0)
    k_h, k_p = jax.random.split(key)

    batch, in_features, out_features = 8, 32, 32
    h = jax.random.normal(k_h, (batch, in_features), jnp.float32)
    w_mu, b_mu, w_ls, b_ls = init_params(k_p, in_features, out_features)

    normal_parameter = make_normal_parameter(w_mu, b_mu, w_ls, b_ls)
    mu, log_sigma = normal_parameter(h)
    jax.block_until_ready((mu, log_sigma))

    assert mu.shape == (batch, out_features)
    assert log_sigma.shape == (batch, out_features)

    # Reference using the same bf16 operand rounding the kernel uses.
    h_bf = h.astype(jnp.bfloat16)
    mu_ref = jnp.dot(h_bf, w_mu.astype(jnp.bfloat16),
                     preferred_element_type=jnp.float32) + b_mu
    ls_ref = jnp.dot(h_bf, w_ls.astype(jnp.bfloat16),
                     preferred_element_type=jnp.float32) + b_ls
    assert jnp.allclose(mu, mu_ref, atol=1e-3, rtol=1e-3)
    assert jnp.allclose(log_sigma, ls_ref, atol=1e-3, rtol=1e-3)

    # Loose sanity check vs the pure-f32 reference (bf16 rounding allowed).
    assert jnp.allclose(mu, h @ w_mu + b_mu, atol=5e-2, rtol=5e-2)
    assert jnp.allclose(log_sigma, h @ w_ls + b_ls, atol=5e-2, rtol=5e-2)

    print("KERNEL_OK")
</pallas_src>

<mosaic_0001>
module attributes {stable_mosaic.version = 11 : i64} {
  func.func @_fused_linear_kernel(%arg0: i32, %arg1: i32, %arg2: memref<8x32xf32, #tpu.memory_space<vmem>>, %arg3: memref<32x128xbf16, #tpu.memory_space<vmem>>, %arg4: memref<1x128xf32, #tpu.memory_space<vmem>>, %arg5: memref<8x128xf32, #tpu.memory_space<vmem>>) attributes {dimension_semantics = [#tpu.dimension_semantics<parallel>, #tpu.dimension_semantics<parallel>], iteration_bounds = array<i64: 2, 1>, scalar_prefetch = 0 : i64, scratch_operands = 0 : i64, tpu.core_type = #tpu.core_type<tc>, window_params = [{transform_indices = @transform_0, window_bounds = array<i64: 8, 32>}, {transform_indices = @transform_1, window_bounds = array<i64: 32, 128>}, {transform_indices = @transform_2, window_bounds = array<i64: 1, 128>}, {transform_indices = @transform_3, window_bounds = array<i64: 8, 128>}]} {
    %c0 = arith.constant 0 : index
    %c0_0 = arith.constant 0 : index
    %0 = vector.load %arg2[%c0, %c0_0] : memref<8x32xf32, #tpu.memory_space<vmem>>, vector<8x32xf32>
    %1 = arith.truncf %0 : vector<8x32xf32> to vector<8x32xbf16>
    %c0_1 = arith.constant 0 : index
    %c0_2 = arith.constant 0 : index
    %2 = vector.load %arg3[%c0_1, %c0_2] : memref<32x128xbf16, #tpu.memory_space<vmem>>, vector<32x128xbf16>
    %cst = arith.constant dense<0.000000e+00> : vector<8x128xf32>
    %3 = tpu.matmul %1, %2, %cst {dimension_numbers = #tpu.dot_dimension_numbers<[1], [0], [0], [1], [0, 0, 1, 1], [], []>} : vector<8x32xbf16>, vector<32x128xbf16>, vector<8x128xf32> -> vector<8x128xf32>
    %c0_3 = arith.constant 0 : index
    %c0_4 = arith.constant 0 : index
    %4 = vector.load %arg4[%c0_3, %c0_4] : memref<1x128xf32, #tpu.memory_space<vmem>>, vector<1x128xf32>
    %5 = vector.broadcast %4 : vector<1x128xf32> to vector<8x128xf32>
    %6 = arith.addf %3, %5 : vector<8x128xf32>
    %c0_5 = arith.constant 0 : index
    %c0_6 = arith.constant 0 : index
    %7 = vector.load %arg5[%c0_5, %c0_6] : memref<8x128xf32, #tpu.memory_space<vmem>>, vector<8x128xf32>
    tpu.vector_store %arg5[%c0_5, %c0_6], %6 {strides = array<i32>} : memref<8x128xf32, #tpu.memory_space<vmem>>, vector<8x128xf32>,
    return
  }
  func.func @transform_0(%arg0: i32, %arg1: i32) -> (i32, i32) {
    %c0_i32 = arith.constant 0 : i32
    %c0_i32_0 = arith.constant 0 : i32
    return %arg1, %c0_i32 : i32, i32
  }
  func.func @transform_1(%arg0: i32, %arg1: i32) -> (i32, i32) {
    %c0_i32 = arith.constant 0 : i32
    %c0_i32_0 = arith.constant 0 : i32
    return %c0_i32, %arg0 : i32, i32
  }
  func.func @transform_2(%arg0: i32, %arg1: i32) -> (i32, i32) {
    %c0_i32 = arith.constant 0 : i32
    %c0_i32_0 = arith.constant 0 : i32
    return %c0_i32, %arg0 : i32, i32
  }
  func.func @transform_3(%arg0: i32, %arg1: i32) -> (i32, i32) {
    %c0_i32 = arith.constant 0 : i32
    return %arg1, %arg0 : i32, i32
  }
}

</mosaic_0001>

<llo_original>
// kernel: apply.1
$region0: #{apply.1}
  #allocation0 [shape = 'u32[]', space=smem, size = 0x4, offset = 0x4, fixed_abs, tag = 'smem constant byte address 0x4 - core index']
  #allocation1 [shape = 'u32[144,128]{1,0:T(1,128)}', space=vmem, size = 0x12000, scoped, tag = 'internal scratch']
  %s0 = inlined_call_operand.vmem [shape: f32[8,32], index: 0, kind: input, shape index: {}]
  %s1 = inlined_call_operand.vmem [shape: bf16[32,256], index: 1, kind: input, shape index: {}]
  %s2 = inlined_call_operand.vmem [shape: f32[1,256], index: 2, kind: input, shape index: {}]
  %s3 = inlined_call_operand.vmem [shape: f32[8,256], index: 3, kind: output, shape index: {}]
  %s4 = sld [smem:[#allocation0]]
  $region86: #{apply.1} parent=0
    _
  %s6 = ssub.s32 1, %s4
  %s7 = scalar_select 0, %s6, %s4
  $region1: #{apply.1} parent=0
    #allocation2 [shape = 'u8[16384]{0}', space=vmem, size = 0x4000, scoped, tag = 'input window, operand 1']
    loop: start=0, step=1, limit=4
    $region2: #{apply.1} parent=1 // loop_pre_header
      _
    $region3: #{apply.1} parent=1 // loop_header
      %s9 = sphi 0, %s13
      %p10 = scmp.ge.s32.totalorder %s9, 4
      %s16 = sphi 0, %s28
      %s17 = sphi 0, %s24
      %s18 = sphi 0, %s16
      %s19 = sphi 0, %s17
      %s20 = sphi 0, %s18
      %s21 = sphi 0, %s19
      %s31 = sphi 0, %s33
      %s34 = sphi 0, %s31
      %s35 = sphi 0, %s34
      %s51 = sphi 0, %s35
      %s57 = sphi 0, %s59
      %s60 = sphi 0, %s57
      %s61 = sphi 0, %s60
      %s77 = sphi 0, %s61
      %s83 = sphi 0, %s85
      %s86 = sphi 0, %s83
      %s87 = sphi 0, %s86
      %s103 = sphi 0, %s87
      %s111 = sphi 0, %s113
      %s114 = sphi 0, %s111
      %s115 = sphi 0, %s114
      %s131 = sphi 0, %s115
    $region4: #{apply.1} parent=1 // loop_header_branch
      %12 = sbr.rel (%p10) target = $region8
    $region5: #{apply.1} parent=1 // loop_body
      %s14 = ssub.s32 %s9, 1
      %s15 = ssub.s32 %s9, 2
      %s22 = sadd.s32 1, %s17
      %p23 = scmp.ge.s32.totalorder %s22, 1
      %s24 = scalar_select %p23, 0, %s22
      %s25 = sadd.s32 1, %s16
      %s26 = scalar_select %p23, %s25, %s16
      %p27 = scmp.ge.s32.totalorder %s26, 2
      %s28 = scalar_select %p27, 0, %s26
      %s29 = ssub.s32 %s17, %s24
      %p30 = scmp.eq.s32.totalorder %s29, 0
      %s32 = sadd.s32 %s31, 1
      %s33 = scalar_select %p30, %s31, %s32
      %p36 = pneg %p30
      %p37 = scmp.eq.s32.totalorder %s9, 1
      %p38 = por %p36, %p37
      %p39 = scmp.ne.s32.totalorder %s31, %s34
      %p40 = scmp.eq.s32.totalorder %s9, 0
      %p41 = por %p39, %p40
      %p42 = scmp.ne.s32.totalorder %s31, %s34
      %p43 = scmp.eq.s32.totalorder %s14, 1
      %p44 = por %p42, %p43
      %p45 = scmp.ne.s32.totalorder %s34, %s35
      %p46 = scmp.eq.s32.totalorder %s14, 0
      %p47 = por %p45, %p46
      %p48 = scmp.ne.s32.totalorder %s34, %s35
      %p49 = scmp.eq.s32.totalorder %s15, 1
      %p50 = por %p48, %p49
      %p52 = scmp.ne.s32.totalorder %s35, %s51
      %p53 = scmp.eq.s32.totalorder %s15, 0
      %p54 = por %p52, %p53
      %s55 = ssub.s32 %s16, %s28
      %p56 = scmp.eq.s32.totalorder %s55, 0
      %s58 = sadd.s32 %s57, 1
      %s59 = scalar_select %p56, %s57, %s58
      %p62 = pneg %p56
      %p63 = scmp.eq.s32.totalorder %s9, 1
      %p64 = por %p62, %p63
      %p65 = scmp.ne.s32.totalorder %s57, %s60
      %p66 = scmp.eq.s32.totalorder %s9, 0
      %p67 = por %p65, %p66
      %p68 = scmp.ne.s32.totalorder %s57, %s60
      %p69 = scmp.eq.s32.totalorder %s14, 1
      %p70 = por %p68, %p69
      %p71 = scmp.ne.s32.totalorder %s60, %s61
      %p72 = scmp.eq.s32.totalorder %s14, 0
      %p73 = por %p71, %p72
      %p74 = scmp.ne.s32.totalorder %s60, %s61
      %p75 = scmp.eq.s32.totalorder %s15, 1
      %p76 = por %p74, %p75
      %p78 = scmp.ne.s32.totalorder %s61, %s77
      %p79 = scmp.eq.s32.totalorder %s15, 0
      %p80 = por %p78, %p79
      %s81 = ssub.s32 %s16, %s28
      %p82 = scmp.eq.s32.totalorder %s81, 0
      %s84 = sadd.s32 %s83, 1
      %s85 = scalar_select %p82, %s83, %s84
      %p88 = pneg %p82
      %p89 = scmp.eq.s32.totalorder %s9, 1
      %p90 = por %p88, %p89
      %p91 = scmp.ne.s32.totalorder %s83, %s86
      %p92 = scmp.eq.s32.totalorder %s9, 0
      %p93 = por %p91, %p92
      %p94 = scmp.ne.s32.totalorder %s83, %s86
      %p95 = scmp.eq.s32.totalorder %s14, 1
      %p96 = por %p94, %p95
      %p97 = scmp.ne.s32.totalorder %s86, %s87
      %p98 = scmp.eq.s32.totalorder %s14, 0
      %p99 = por %p97, %p98
      %p100 = scmp.ne.s32.totalorder %s86, %s87
      %p101 = scmp.eq.s32.totalorder %s15, 1
      %p102 = por %p100, %p101
      %p104 = scmp.ne.s32.totalorder %s87, %s103
      %p105 = scmp.eq.s32.totalorder %s15, 0
      %p106 = por %p104, %p105
      %s107 = ssub.s32 %s17, %s24
      %s108 = ssub.s32 %s16, %s28
      %s109 = sor.u32 %s107, %s108
      %p110 = scmp.eq.s32.totalorder %s109, 0
      %s112 = sadd.s32 %s111, 1
      %s113 = scalar_select %p110, %s111, %s112
      %p116 = pneg %p110
      %p117 = scmp.eq.s32.totalorder %s9, 1
      %p118 = por %p116, %p117
      %p119 = scmp.ne.s32.totalorder %s111, %s114
      %p120 = scmp.eq.s32.totalorder %s9, 0
      %p121 = por %p119, %p120
      %p122 = scmp.ne.s32.totalorder %s111, %s114
      %p123 = scmp.eq.s32.totalorder %s14, 1
      %p124 = por %p122, %p123
      %p125 = scmp.ne.s32.totalorder %s114, %s115
      %p126 = scmp.eq.s32.totalorder %s14, 0
      %p127 = por %p125, %p126
      %p128 = scmp.ne.s32.totalorder %s114, %s115
      %p129 = scmp.eq.s32.totalorder %s15, 1
      %p130 = por %p128, %p129
      %p132 = scmp.ne.s32.totalorder %s115, %s131
      %p133 = scmp.eq.s32.totalorder %s15, 0
      %p134 = por %p132, %p133
      %p135 = scmp.le.s32.totalorder 1, %s9
      %p136 = scmp.lt.s32.totalorder %s9, 3
      %p137 = pnand %p135, %p136
      %p138 = pneg %p137
      // Predicated region
      $region9: #{apply.1} parent=5 // pred_check
        _
      $region10: #{apply.1} parent=5 // pred_check_branch
        %140 = sbr.rel (%p137) target = $region12
      $region11: #{apply.1} parent=5 // pred_region
        %s141 = ssub.s32 %s9, 1
        // Predicated region
        $region13: #{apply.1} parent=11 // pred_check
          %p142 = pneg %p47
        $region14: #{apply.1} parent=11 // pred_check_branch
          %144 = sbr.rel (%p142) target = $region16
        $region15: #{apply.1} parent=11 // pred_region
          %p145 = scmp.lt.s32.totalorder %s19, 0
          %s146 = scalar_select %p145, %s19, 0
          %s147 = smul.addr %s146, 8
          %s148 = scalar_lea.vmem %s0, %s147
        $region16: #{apply.1} parent=11 // pred_fallthru
          _
      $region12: #{apply.1} parent=5 // pred_fallthru
        _
      %p149 = scmp.lt.s32.totalorder %s9, 2
      // Predicated region
      $region17: #{apply.1} parent=5 // pred_check
        %p150 = pneg %p149
      $region18: #{apply.1} parent=5 // pred_check_branch
        %152 = sbr.rel (%p150) target = $region20
      $region19: #{apply.1} parent=5 // pred_region
        // Predicated region
        $region21: #{apply.1} parent=19 // pred_check
          %p153 = pneg %p67
        $region22: #{apply.1} parent=19 // pred_check_branch
          %155 = sbr.rel (%p153) target = $region24
        $region23: #{apply.1} parent=19 // pred_region
          %s156 = sand.u32 %s57, 1
          %s157 = sand.u32 %s57, 1
          %s158 = smul.addr %s157, 16
          %s159 = scalar_lea.vmem [#allocation2], %s158
          %s160 = smul.addr %s16, 4
          %s161 = scalar_lea.vmem %s1, %s160
          // Predicated region
          $region25: #{apply.1} parent=23 // pred_check
            _
          $region26: #{apply.1} parent=23 // pred_check_branch
            %163 = sbr.rel (0) target = $region28
          $region27: #{apply.1} parent=23 // pred_region
            // Predicated region
            $region29: #{apply.1} parent=27 // pred_check
              _
            $region30: #{apply.1} parent=27 // pred_check_branch
              %165 = sbr.rel target = $region32
            $region31: #{apply.1} parent=27 // pred_region
              // Predicated region
              $region44: #{apply.1} parent=31 // pred_check
                _
              $region45: #{apply.1} parent=31 // pred_check_branch
                %186 = sbr.rel (0) target = $region47
              $region46: #{apply.1} parent=31 // pred_region
                loop: start=0, step=1, limit=1
                $region48: #{apply.1} parent=46 // loop_pre_header
                  _
                $region49: #{apply.1} parent=46 // loop_header
                  %s188 = sphi 0, %s192
                  %p189 = scmp.ge.s32.totalorder %s188, 1
                  %s193 = sphi %s161, %s161
                  %s194 = sphi %s159, %s159
                $region50: #{apply.1} parent=46 // loop_header_branch
                  %191 = sbr.rel (%p189) target = $region54
                $region51: #{apply.1} parent=46 // loop_body
                  _
                $region52: #{apply.1} parent=46 // loop_footer
                  %s192 = sadd.s32 1, %s188
                $region53: #{apply.1} parent=46 // loop_footer_branch
                  %187 = sbr.rel target = $region49
                $region54: #{apply.1} parent=46 // loop_exit
                  _
                loop: start=0, step=1, limit=1
                $region55: #{apply.1} parent=46 // loop_pre_header
                  _
                $region56: #{apply.1} parent=46 // loop_header
                  %s197 = sphi 0, %s201
                  %p198 = scmp.ge.s32.totalorder %s197, 1
                  %s202 = sphi %s161, %s161
                  %s203 = sphi %s159, %s159
                $region57: #{apply.1} parent=46 // loop_header_branch
                  %200 = sbr.rel (%p198) target = $region61
                $region58: #{apply.1} parent=46 // loop_body
                  %v204 = vld [vmem:[%s202] sm:$0xf]
                  %205 = vst [vmem:[%s203] sm:$0xf] %v204
                  %v206 = vld [vmem:[%s202 + $0x8] sm:$0xf]
                  %207 = vst [vmem:[%s203 + $0x4] sm:$0xf] %v206
                  %v208 = vld [vmem:[%s202 + $0x10] sm:$0xf]
                  %209 = vst [vmem:[%s203 + $0x8] sm:$0xf] %v208
                  %v210 = vld [vmem:[%s202 + $0x18] sm:$0xf]
                  %211 = vst [vmem:[%s203 + $0xc] sm:$0xf] %v210
                $region59: #{apply.1} parent=46 // loop_footer
                  %s201 = sadd.s32 1, %s197
                $region60: #{apply.1} parent=46 // loop_footer_branch
                  %196 = sbr.rel target = $region56
                $region61: #{apply.1} parent=46 // loop_exit
                  _
              $region47: #{apply.1} parent=31 // pred_fallthru
                _
            $region32: #{apply.1} parent=27 // pred_fallthru
              _
            // Predicated region
            $region33: #{apply.1} parent=27 // pred_check
              _
            $region34: #{apply.1} parent=27 // pred_check_branch
              %167 = sbr.rel (0) target = $region36
            $region35: #{apply.1} parent=27 // pred_region
              loop: start=0, step=1, limit=1
              $region37: #{apply.1} parent=35 // loop_pre_header
                _
              $region38: #{apply.1} parent=35 // loop_header
                %s170 = sphi 0, %s174
                %p171 = scmp.ge.s32.totalorder %s170, 1
                %s175 = sphi %s161, %s161
                %s176 = sphi %s159, %s159
              $region39: #{apply.1} parent=35 // loop_header_branch
                %173 = sbr.rel (%p171) target = $region43
              $region40: #{apply.1} parent=35 // loop_body
                %v177 = vld [vmem:[%s175] sm:$0xf]
                %178 = vst [vmem:[%s176] sm:$0xf] %v177
                %v179 = vld [vmem:[%s175 + $0x8] sm:$0xf]
                %180 = vst [vmem:[%s176 + $0x4] sm:$0xf] %v179
                %v181 = vld [vmem:[%s175 + $0x10] sm:$0xf]
                %182 = vst [vmem:[%s176 + $0x8] sm:$0xf] %v181
                %v183 = vld [vmem:[%s175 + $0x18] sm:$0xf]
                %184 = vst [vmem:[%s176 + $0xc] sm:$0xf] %v183
              $region41: #{apply.1} parent=35 // loop_footer
                %s174 = sadd.s32 1, %s170
              $region42: #{apply.1} parent=35 // loop_footer_branch
                %169 = sbr.rel target = $region38
              $region43: #{apply.1} parent=35 // loop_exit
                _
            $region36: #{apply.1} parent=27 // pred_fallthru
              _
          $region28: #{apply.1} parent=23 // pred_fallthru
            _
          %212 = vnop
        $region24: #{apply.1} parent=19 // pred_fallthru
          _
        // Predicated region
        $region62: #{apply.1} parent=19 // pred_check
          %p213 = pneg %p93
        $region63: #{apply.1} parent=19 // pred_check_branch
          %215 = sbr.rel (%p213) target = $region65
        $region64: #{apply.1} parent=19 // pred_region
          %p216 = scmp.lt.s32.totalorder %s16, 1
          %s217 = scalar_select %p216, %s16, 1
          %s218 = scalar_lea.vmem %s2, %s217
        $region65: #{apply.1} parent=19 // pred_fallthru
          _
      $region20: #{apply.1} parent=5 // pred_fallthru
        _
      %p219 = scmp.le.s32.totalorder 1, %s9
      %p220 = scmp.lt.s32.totalorder %s9, 3
      %p221 = pnand %p219, %p220
      %p222 = pneg %p221
      // Predicated region
      $region66: #{apply.1} parent=5 // pred_check
        _
      $region67: #{apply.1} parent=5 // pred_check_branch
        %224 = sbr.rel (%p221) target = $region69
      $region68: #{apply.1} parent=5 // pred_region
        %s225 = ssub.s32 %s9, 1
        %s226 = sand.u32 %s60, 1
        %s227 = sand.u32 %s60, 1
        %s228 = smul.addr %s227, 16
        %s229 = scalar_lea.vmem [#allocation2], %s228
        // Predicated region
        $region70: #{apply.1} parent=68 // pred_check
          %p230 = pneg %p73
        $region71: #{apply.1} parent=68 // pred_check_branch
          %232 = sbr.rel (%p230) target = $region73
        $region72: #{apply.1} parent=68 // pred_region
          _
        $region73: #{apply.1} parent=68 // pred_fallthru
          _
        %p233 = scmp.lt.s32.totalorder %s19, 0
        %s234 = scalar_select %p233, %s19, 0
        %s235 = smul.addr %s234, 8
        %s236 = scalar_lea.vmem %s0, %s235
        %p237 = pneg %p47
        %p238 = pneg %p44
        %s239 = sand.u32 %s60, 1
        %s240 = sand.u32 %s60, 1
        %s241 = smul.addr %s240, 16
        %s242 = scalar_lea.vmem [#allocation2], %s241
        %p243 = pneg %p73
        %p244 = pneg %p70
        %p245 = scmp.lt.s32.totalorder %s18, 1
        %s246 = scalar_select %p245, %s18, 1
        %s247 = scalar_lea.vmem %s2, %s246
        %p248 = pneg %p99
        %p249 = pneg %p96
        %p250 = pneg %p127
        %p251 = pneg %p124
        %p252 = scmp.lt.s32.totalorder %s19, 0
        %s253 = scalar_select %p252, %s19, 0
        %p254 = scmp.lt.s32.totalorder %s18, 1
        %s255 = scalar_select %p254, %s18, 1
        %s256 = smul.addr %s253, 2
        %s257 = sadd.s32 %s255, %s256
        %s258 = smul.addr %s257, 8
        %s259 = scalar_lea.vmem %s3, %s258
        %p260 = scmp.lt.s32.totalorder %s19, 0
        %s261 = scalar_select %p260, %s19, 0
        %s262 = smul.addr %s261, 8
        %s263 = scalar_lea.vmem %s0, %s262
        %p264 = scmp.lt.s32.totalorder %s18, 1
        %s265 = scalar_select %p264, %s18, 1
        %s266 = scalar_lea.vmem %s2, %s265
        %p267 = scmp.lt.s32.totalorder %s19, 0
        %s268 = scalar_select %p267, %s19, 0
        %p269 = scmp.lt.s32.totalorder %s18, 1
        %s270 = scalar_select %p269, %s18, 1
        %s271 = smul.addr %s268, 2
        %s272 = sadd.s32 %s270, %s271
        %s273 = smul.addr %s272, 8
        %s274 = scalar_lea.vmem %s3, %s273
        %v276 = vld [vmem:[%s263] sm:$0xff]
        %v277 = vpack.c.bf16 %v276, %v276
        %v278 = vld [vmem:[%s229] sm:$0xf]
        %v279 = vld [vmem:[%s229 + $0x4] sm:$0xf]
        %v280 = vld [vmem:[%s229 + $0x8] sm:$0xf]
        %v281 = vld [vmem:[%s229 + $0xc] sm:$0xf]
        %v282 = vld [vmem:[%s266] sm:$0x1]
        %v284 = vlaneseq
        %v285 = vshrl.u32 %v284, 7
        %v286 = vsub.s32 0, %v285
        %v287 = vrot.slane %v282, %v286
        %v293 = vunpack.c.l.b16 %v278
        %v294 = vunpack.c.l.b16 %v279
        %v295 = vunpack.c.l.b16 %v280
        %v296 = vunpack.c.l.b16 %v281
        %v297 = vpack.c.b16 %v294, %v293
        %v298 = vpack.c.b16 %v296, %v295
        %vm301 = vcmask 261120
        %v303 = vsel %vm301, %v277, 0
        %305 = vmatprep.subr.bf16.mxu0 0
        %306 = vmatpush1.bf16.msra.mxu0 %v297
        %307 = vmatprep.subr.bf16.mxu0 0
        %308 = vmatpush1.bf16.msra.mxu0 %v298
        %309 = vmatprep.subr.bf16.mxu0 0
        %310 = vmatpush1.bf16.msra.mxu0 0
        %311 = vmatprep.subr.bf16.mxu0 0
        %312 = vmatpush1.bf16.msra.mxu0 0
        %313 = vmatprep.subr.bf16.mxu0 0
        %314 = vmatpush1.bf16.msra.mxu0 0
        %315 = vmatprep.subr.bf16.mxu0 0
        %316 = vmatpush1.bf16.msra.mxu0 0
        %317 = vmatprep.subr.bf16.mxu0 0
        %318 = vmatpush1.bf16.msra.mxu0 0
        %319 = vmatprep.subr.bf16.mxu0 0
        %320 = vmatpush1.bf16.msra.mxu0 0
        %321 = vmatprep.subr.bf16.mxu0 0
        %322 = vmatpush1.bf16.msra.mxu0 0
        %323 = vmatprep.subr.bf16.mxu0 0
        %324 = vmatpush1.bf16.msra.mxu0 0
        %325 = vmatprep.subr.bf16.mxu0 0
        %326 = vmatpush1.bf16.msra.mxu0 0
        %327 = vmatprep.subr.bf16.mxu0 0
        %328 = vmatpush1.bf16.msra.mxu0 0
        %329 = vmatprep.subr.bf16.mxu0 0
        %330 = vmatpush1.bf16.msra.mxu0 0
        %331 = vmatprep.subr.bf16.mxu0 0
        %332 = vmatpush1.bf16.msra.mxu0 0
        %333 = vmatprep.subr.bf16.mxu0 0
        %334 = vmatpush1.bf16.msra.mxu0 0
        %335 = vmatprep.subr.bf16.mxu0 0
        %336 = vmatpush1.bf16.msra.mxu0 0
        %337 = vmatprep.mubr.bf16.mxu0 0
        %338 = vmatmul.mubr.bf16.gmra.mrb[0].mxu0 %v303
        %v339 = vpop.f32.mrb[0].mxu0
        %v340 = vadd.f32 %v287, %v339
        %v341 = vpop.f32.mrb[0].mxu0
        %v342 = vpop.f32.mrb[0].mxu0
        %v343 = vpop.f32.mrb[0].mxu0
        %344 = vdwg.mxu0
        %345 = vst [vmem:[%s274] sm:$0xff] %v340
        %p346 = scmp.lt.s32.totalorder %s19, 0
        %s347 = scalar_select %p346, %s19, 0
        %p348 = scmp.lt.s32.totalorder %s18, 1
        %s349 = scalar_select %p348, %s18, 1
        %s350 = smul.addr %s347, 2
        %s351 = sadd.s32 %s349, %s350
        %s352 = smul.addr %s351, 8
        %s353 = scalar_lea.vmem %s3, %s352
        // Predicated region
        $region74: #{apply.1} parent=68 // pred_check
          %p354 = pneg %p124
        $region75: #{apply.1} parent=68 // pred_check_branch
          %356 = sbr.rel (%p354) target = $region77
        $region76: #{apply.1} parent=68 // pred_region
          _
        $region77: #{apply.1} parent=68 // pred_fallthru
          _
      $region69: #{apply.1} parent=5 // pred_fallthru
        _
      %p357 = scmp.le.s32.totalorder 2, %s9
      // Predicated region
      $region78: #{apply.1} parent=5 // pred_check
        %p358 = pneg %p357
      $region79: #{apply.1} parent=5 // pred_check_branch
        %360 = sbr.rel (%p358) target = $region81
      $region80: #{apply.1} parent=5 // pred_region
        %s361 = ssub.s32 %s9, 2
        // Predicated region
        $region82: #{apply.1} parent=80 // pred_check
          %p362 = pneg %p130
        $region83: #{apply.1} parent=80 // pred_check_branch
          %364 = sbr.rel (%p362) target = $region85
        $region84: #{apply.1} parent=80 // pred_region
          %p365 = scmp.lt.s32.totalorder %s21, 0
          %s366 = scalar_select %p365, %s21, 0
          %p367 = scmp.lt.s32.totalorder %s20, 1
          %s368 = scalar_select %p367, %s20, 1
          %s369 = smul.addr %s366, 2
          %s370 = sadd.s32 %s368, %s369
          %s371 = smul.addr %s370, 8
          %s372 = scalar_lea.vmem %s3, %s371
        $region85: #{apply.1} parent=80 // pred_fallthru
          _
      $region81: #{apply.1} parent=5 // pred_fallthru
        _
    $region6: #{apply.1} parent=1 // loop_footer
      %s13 = sadd.s32 1, %s9
    $region7: #{apply.1} parent=1 // loop_footer_branch
      %8 = sbr.rel target = $region3
    $region8: #{apply.1} parent=1 // loop_exit
      _

</llo_original>
